<compile_context>
chip_gen: v5e
topology: v5e:2x2
jax: 0.10.0
libtpu: 0.0.40
codegen_flags: <defaults>
</compile_context>

<pallas_src>
import jax
import jax.numpy as jnp
from jax.experimental import pallas as pl
from jax.experimental.pallas import tpu as pltpu

_OUT_PAD = 128  # lane-dense padded width of the final (32 -> 2) layer


def _round_up(n, m):
    return ((n + m - 1) // m) * m


def _mlp_kernel(x_ref,
                w1_ref, t1_ref,
                w2_ref, t2_ref,
                w3_ref, t3_ref,
                w4_ref, t4_ref,
                w5_ref, b5_ref,
                o_ref):
    """One batch tile of the whole forward pass.  Weights are bf16 and
    BN-scale-folded; shifts/bias are f32 (1, N)."""
    h = x_ref[...]                                           # bf16 (TB, d_in)

    # fc1 (+ folded bn1) + relu        (dropout1 == identity in eval mode)
    h = jnp.dot(h, w1_ref[...], preferred_element_type=jnp.float32)
    h = jnp.maximum(h + t1_ref[...], 0.0)

    # fc2 (+ folded bn2) + relu
    h = jnp.dot(h.astype(jnp.bfloat16), w2_ref[...],
                preferred_element_type=jnp.float32)
    h = jnp.maximum(h + t2_ref[...], 0.0)

    # fc3 (+ folded bn3) + relu
    h = jnp.dot(h.astype(jnp.bfloat16), w3_ref[...],
                preferred_element_type=jnp.float32)
    h = jnp.maximum(h + t3_ref[...], 0.0)

    # fc4 (+ folded bn4) + relu
    h = jnp.dot(h.astype(jnp.bfloat16), w4_ref[...],
                preferred_element_type=jnp.float32)
    h = jnp.maximum(h + t4_ref[...], 0.0)

    # fc5 (padded to 128 lanes; no BN / activation)
    o_ref[...] = jnp.dot(h.astype(jnp.bfloat16), w5_ref[...],
                         preferred_element_type=jnp.float32) + b5_ref[...]


def _fold_bn_into_weight(w, b, gamma, beta, mean, var, eps=1e-5):
    """relu(bn(x @ W + b)) == relu(x @ (W * scale) + shift).
    Returns (bf16 folded weight, f32 (1, N) shift)."""
    scale = gamma / jnp.sqrt(var + eps)
    w_folded = (w * scale[None, :]).astype(jnp.bfloat16)
    shift = ((b - mean) * scale + beta).reshape(1, -1).astype(jnp.float32)
    return w_folded, shift


@jax.jit
def neuralnet_forward(x, params):
    (w1, b1, g1, be1, m1, v1,
     w2, b2, g2, be2, m2, v2,
     w3, b3, g3, be3, m3, v3,
     w4, b4, g4, be4, m4, v4,
     w5, b5) = params

    # Fold BN scale into weights; keep shifts in f32.
    w1f, t1 = _fold_bn_into_weight(w1, b1, g1, be1, m1, v1)
    w2f, t2 = _fold_bn_into_weight(w2, b2, g2, be2, m2, v2)
    w3f, t3 = _fold_bn_into_weight(w3, b3, g3, be3, m3, v3)
    w4f, t4 = _fold_bn_into_weight(w4, b4, g4, be4, m4, v4)

    # Pad fc5 to a lane-dense 128-wide output.
    n_out = w5.shape[1]
    w5p = jnp.zeros((w5.shape[0], _OUT_PAD), jnp.float32)
    w5p = w5p.at[:, :n_out].set(w5).astype(jnp.bfloat16)
    b5p = jnp.zeros((1, _OUT_PAD), jnp.float32).at[0, :n_out].set(b5)

    batch, d_in = x.shape
    # Batch tile: multiple of 8 (sublane), capped at 512 rows (fits default
    # scoped VMEM on v5e/v6e/v7x with plenty of headroom: ~110 KB of bf16
    # weights resident + double-buffered x/out tiles + TBx256 f32 peak
    # intermediate ~0.8 MB at TB=512).
    TB = min(512, _round_up(batch, 8))
    padded = _round_up(batch, TB)
    grid = (padded // TB,)

    x_p = x.astype(jnp.bfloat16)
    if padded != batch:
        x_p = jnp.pad(x_p, ((0, padded - batch), (0, 0)))

    def resident(shape):
        # Constant index_map -> operand stays in VMEM across all grid steps.
        return pl.BlockSpec(shape, lambda i: (0, 0))

    in_specs = [
        pl.BlockSpec((TB, d_in), lambda i: (i, 0)),          # x tile
        resident(w1f.shape), resident(t1.shape),
        resident(w2f.shape), resident(t2.shape),
        resident(w3f.shape), resident(t3.shape),
        resident(w4f.shape), resident(t4.shape),
        resident(w5p.shape), resident(b5p.shape),
    ]
    out_specs = pl.BlockSpec((TB, _OUT_PAD), lambda i: (i, 0))

    dims = [d_in, 256, 128, 64, 32, _OUT_PAD]
    flops = 2 * padded * sum(dims[i] * dims[i + 1] for i in range(len(dims) - 1))
    weight_bytes = 2 * sum(dims[i] * dims[i + 1] for i in range(len(dims) - 1))
    shift_bytes = 4 * (256 + 128 + 64 + 32 + _OUT_PAD)
    io_bytes = padded * (d_in * 2 + _OUT_PAD * 4)
    cost = pl.CostEstimate(flops=flops, transcendentals=0,
                           bytes_accessed=weight_bytes + shift_bytes + io_bytes)

    out = pl.pallas_call(
        _mlp_kernel,
        out_shape=jax.ShapeDtypeStruct((padded, _OUT_PAD), jnp.float32),
        grid=grid,
        in_specs=in_specs,
        out_specs=out_specs,
        compiler_params=pltpu.CompilerParams(
            dimension_semantics=("parallel",)),
        cost_estimate=cost,
    )(x_p,
      w1f, t1, w2f, t2, w3f, t3, w4f, t4, w5p, b5p)

    return out[:batch, :n_out]


def init_params(key, input_dim):
    """Deterministic init mimicking PyTorch defaults.
       Linear: U(-1/sqrt(fan_in), 1/sqrt(fan_in)) for W and b; W stored
       pre-transposed as (in, out).  BatchNorm1d: gamma=1, beta=0,
       running_mean=0, running_var=1."""
    dims = [input_dim, 256, 128, 64, 32, 2]
    params = []
    keys = jax.random.split(key, 2 * (len(dims) - 1))
    for i in range(len(dims) - 1):
        fan_in, fan_out = dims[i], dims[i + 1]
        bound = 1.0 / jnp.sqrt(fan_in)
        w = jax.random.uniform(keys[2 * i], (fan_in, fan_out),
                               jnp.float32, -bound, bound)
        b = jax.random.uniform(keys[2 * i + 1], (fan_out,),
                               jnp.float32, -bound, bound)
        params.extend([w, b])
        if i < len(dims) - 2:  # layers 1..4 have BatchNorm
            params.extend([
                jnp.ones((fan_out,), jnp.float32),    # gamma
                jnp.zeros((fan_out,), jnp.float32),   # beta
                jnp.zeros((fan_out,), jnp.float32),   # running_mean
                jnp.ones((fan_out,), jnp.float32),    # running_var
            ])
    return tuple(params)


def reference_forward(x, params):
    """Plain-JAX f32 reference (eval-mode semantics of the PyTorch module)."""
    (w1, b1, g1, be1, m1, v1,
     w2, b2, g2, be2, m2, v2,
     w3, b3, g3, be3, m3, v3,
     w4, b4, g4, be4, m4, v4,
     w5, b5) = params
    eps = 1e-5

    def layer(h, w, b, g, be, m, v):
        y = h @ w + b
        y = (y - m) / jnp.sqrt(v + eps) * g + be
        return jnp.maximum(y, 0.0)

    h = layer(x, w1, b1, g1, be1, m1, v1)   # dropout = identity (eval)
    h = layer(h, w2, b2, g2, be2, m2, v2)
    h = layer(h, w3, b3, g3, be3, m3, v3)
    h = layer(h, w4, b4, g4, be4, m4, v4)
    return h @ w5 + b5


if __name__ == "__main__":
    key = jax.random.PRNGKey(0)
    k_param, k_x1, k_x2 = jax.random.split(key, 3)

    input_dim = 32
    params = init_params(k_param, input_dim)

    # Small case (single grid step, full-array tile).
    x_small = jax.random.normal(k_x1, (8, input_dim), jnp.float32)
    out_small = jax.block_until_ready(neuralnet_forward(x_small, params))
    ref_small = reference_forward(x_small, params)
    assert out_small.shape == (8, 2)
    assert jnp.allclose(out_small, ref_small, atol=5e-2, rtol=5e-2), \
        "small-batch mismatch vs reference"

    # Larger, non-multiple batch: exercises TB=512 tiles, grid=2, and padding.
    x_big = jax.random.normal(k_x2, (1000, input_dim), jnp.float32)
    out_big = jax.block_until_ready(neuralnet_forward(x_big, params))
    ref_big = reference_forward(x_big, params)
    assert out_big.shape == (1000, 2)
    assert jnp.allclose(out_big, ref_big, atol=5e-2, rtol=5e-2), \
        "large-batch mismatch vs reference"

    print("KERNEL_OK")
</pallas_src>

<mosaic_0001>
module attributes {stable_mosaic.version = 11 : i64} {
  func.func @_mlp_kernel(%arg0: i32, %arg1: memref<8x32xbf16, #tpu.memory_space<vmem>>, %arg2: memref<32x256xbf16, #tpu.memory_space<vmem>>, %arg3: memref<1x256xf32, #tpu.memory_space<vmem>>, %arg4: memref<256x128xbf16, #tpu.memory_space<vmem>>, %arg5: memref<1x128xf32, #tpu.memory_space<vmem>>, %arg6: memref<128x64xbf16, #tpu.memory_space<vmem>>, %arg7: memref<1x64xf32, #tpu.memory_space<vmem>>, %arg8: memref<64x32xbf16, #tpu.memory_space<vmem>>, %arg9: memref<1x32xf32, #tpu.memory_space<vmem>>, %arg10: memref<32x128xbf16, #tpu.memory_space<vmem>>, %arg11: memref<1x128xf32, #tpu.memory_space<vmem>>, %arg12: memref<8x128xf32, #tpu.memory_space<vmem>>) attributes {dimension_semantics = [#tpu.dimension_semantics<parallel>], iteration_bounds = array<i64: 1>, scalar_prefetch = 0 : i64, scratch_operands = 0 : i64, tpu.core_type = #tpu.core_type<tc>, window_params = [{transform_indices = @transform_0, window_bounds = array<i64: 8, 32>}, {pipeline_mode = #tpu.pipeline_mode<synchronous>, transform_indices = @transform_1, window_bounds = array<i64: 32, 256>}, {pipeline_mode = #tpu.pipeline_mode<synchronous>, transform_indices = @transform_2, window_bounds = array<i64: 1, 256>}, {pipeline_mode = #tpu.pipeline_mode<synchronous>, transform_indices = @transform_3, window_bounds = array<i64: 256, 128>}, {pipeline_mode = #tpu.pipeline_mode<synchronous>, transform_indices = @transform_4, window_bounds = array<i64: 1, 128>}, {pipeline_mode = #tpu.pipeline_mode<synchronous>, transform_indices = @transform_5, window_bounds = array<i64: 128, 64>}, {pipeline_mode = #tpu.pipeline_mode<synchronous>, transform_indices = @transform_6, window_bounds = array<i64: 1, 64>}, {pipeline_mode = #tpu.pipeline_mode<synchronous>, transform_indices = @transform_7, window_bounds = array<i64: 64, 32>}, {pipeline_mode = #tpu.pipeline_mode<synchronous>, transform_indices = @transform_8, window_bounds = array<i64: 1, 32>}, {pipeline_mode = #tpu.pipeline_mode<synchronous>, transform_indices = @transform_9, window_bounds = array<i64: 32, 128>}, {pipeline_mode = #tpu.pipeline_mode<synchronous>, transform_indices = @transform_10, window_bounds = array<i64: 1, 128>}, {transform_indices = @transform_11, window_bounds = array<i64: 8, 128>}]} {
    %c0 = arith.constant 0 : index
    %c0_0 = arith.constant 0 : index
    %0 = vector.load %arg1[%c0, %c0_0] : memref<8x32xbf16, #tpu.memory_space<vmem>>, vector<8x32xbf16>
    %c0_1 = arith.constant 0 : index
    %c0_2 = arith.constant 0 : index
    %1 = vector.load %arg2[%c0_1, %c0_2] : memref<32x256xbf16, #tpu.memory_space<vmem>>, vector<32x256xbf16>
    %cst = arith.constant dense<0.000000e+00> : vector<8x256xf32>
    %2 = tpu.matmul %0, %1, %cst {dimension_numbers = #tpu.dot_dimension_numbers<[1], [0], [0], [1], [0, 0, 1, 1], [], []>} : vector<8x32xbf16>, vector<32x256xbf16>, vector<8x256xf32> -> vector<8x256xf32>
    %c0_3 = arith.constant 0 : index
    %c0_4 = arith.constant 0 : index
    %3 = vector.load %arg3[%c0_3, %c0_4] : memref<1x256xf32, #tpu.memory_space<vmem>>, vector<1x256xf32>
    %4 = vector.broadcast %3 : vector<1x256xf32> to vector<8x256xf32>
    %5 = arith.addf %2, %4 : vector<8x256xf32>
    %cst_5 = arith.constant 0.000000e+00 : f32
    %6 = vector.broadcast %cst_5 : f32 to vector<8x256xf32>
    %7 = arith.maximumf %5, %6 : vector<8x256xf32>
    %8 = arith.truncf %7 : vector<8x256xf32> to vector<8x256xbf16>
    %c0_6 = arith.constant 0 : index
    %c0_7 = arith.constant 0 : index
    %9 = vector.load %arg4[%c0_6, %c0_7] : memref<256x128xbf16, #tpu.memory_space<vmem>>, vector<256x128xbf16>
    %cst_8 = arith.constant dense<0.000000e+00> : vector<8x128xf32>
    %10 = tpu.matmul %8, %9, %cst_8 {dimension_numbers = #tpu.dot_dimension_numbers<[1], [0], [0], [1], [0, 0, 1, 1], [], []>} : vector<8x256xbf16>, vector<256x128xbf16>, vector<8x128xf32> -> vector<8x128xf32>
    %c0_9 = arith.constant 0 : index
    %c0_10 = arith.constant 0 : index
    %11 = vector.load %arg5[%c0_9, %c0_10] : memref<1x128xf32, #tpu.memory_space<vmem>>, vector<1x128xf32>
    %12 = vector.broadcast %11 : vector<1x128xf32> to vector<8x128xf32>
    %13 = arith.addf %10, %12 : vector<8x128xf32>
    %cst_11 = arith.constant 0.000000e+00 : f32
    %14 = vector.broadcast %cst_11 : f32 to vector<8x128xf32>
    %15 = arith.maximumf %13, %14 : vector<8x128xf32>
    %16 = arith.truncf %15 : vector<8x128xf32> to vector<8x128xbf16>
    %c0_12 = arith.constant 0 : index
    %c0_13 = arith.constant 0 : index
    %17 = vector.load %arg6[%c0_12, %c0_13] : memref<128x64xbf16, #tpu.memory_space<vmem>>, vector<128x64xbf16>
    %cst_14 = arith.constant dense<0.000000e+00> : vector<8x64xf32>
    %18 = tpu.matmul %16, %17, %cst_14 {dimension_numbers = #tpu.dot_dimension_numbers<[1], [0], [0], [1], [0, 0, 1, 1], [], []>} : vector<8x128xbf16>, vector<128x64xbf16>, vector<8x64xf32> -> vector<8x64xf32>
    %c0_15 = arith.constant 0 : index
    %c0_16 = arith.constant 0 : index
    %19 = vector.load %arg7[%c0_15, %c0_16] : memref<1x64xf32, #tpu.memory_space<vmem>>, vector<1x64xf32>
    %20 = vector.broadcast %19 : vector<1x64xf32> to vector<8x64xf32>
    %21 = arith.addf %18, %20 : vector<8x64xf32>
    %cst_17 = arith.constant 0.000000e+00 : f32
    %22 = vector.broadcast %cst_17 : f32 to vector<8x64xf32>
    %23 = arith.maximumf %21, %22 : vector<8x64xf32>
    %24 = arith.truncf %23 : vector<8x64xf32> to vector<8x64xbf16>
    %c0_18 = arith.constant 0 : index
    %c0_19 = arith.constant 0 : index
    %25 = vector.load %arg8[%c0_18, %c0_19] : memref<64x32xbf16, #tpu.memory_space<vmem>>, vector<64x32xbf16>
    %cst_20 = arith.constant dense<0.000000e+00> : vector<8x32xf32>
    %26 = tpu.matmul %24, %25, %cst_20 {dimension_numbers = #tpu.dot_dimension_numbers<[1], [0], [0], [1], [0, 0, 1, 1], [], []>} : vector<8x64xbf16>, vector<64x32xbf16>, vector<8x32xf32> -> vector<8x32xf32>
    %c0_21 = arith.constant 0 : index
    %c0_22 = arith.constant 0 : index
    %27 = vector.load %arg9[%c0_21, %c0_22] : memref<1x32xf32, #tpu.memory_space<vmem>>, vector<1x32xf32>
    %28 = vector.broadcast %27 : vector<1x32xf32> to vector<8x32xf32>
    %29 = arith.addf %26, %28 : vector<8x32xf32>
    %cst_23 = arith.constant 0.000000e+00 : f32
    %30 = vector.broadcast %cst_23 : f32 to vector<8x32xf32>
    %31 = arith.maximumf %29, %30 : vector<8x32xf32>
    %32 = arith.truncf %31 : vector<8x32xf32> to vector<8x32xbf16>
    %c0_24 = arith.constant 0 : index
    %c0_25 = arith.constant 0 : index
    %33 = vector.load %arg10[%c0_24, %c0_25] : memref<32x128xbf16, #tpu.memory_space<vmem>>, vector<32x128xbf16>
    %cst_26 = arith.constant dense<0.000000e+00> : vector<8x128xf32>
    %34 = tpu.matmul %32, %33, %cst_26 {dimension_numbers = #tpu.dot_dimension_numbers<[1], [0], [0], [1], [0, 0, 1, 1], [], []>} : vector<8x32xbf16>, vector<32x128xbf16>, vector<8x128xf32> -> vector<8x128xf32>
    %c0_27 = arith.constant 0 : index
    %c0_28 = arith.constant 0 : index
    %35 = vector.load %arg11[%c0_27, %c0_28] : memref<1x128xf32, #tpu.memory_space<vmem>>, vector<1x128xf32>
    %36 = vector.broadcast %35 : vector<1x128xf32> to vector<8x128xf32>
    %37 = arith.addf %34, %36 : vector<8x128xf32>
    %c0_29 = arith.constant 0 : index
    %c0_30 = arith.constant 0 : index
    %38 = vector.load %arg12[%c0_29, %c0_30] : memref<8x128xf32, #tpu.memory_space<vmem>>, vector<8x128xf32>
    tpu.vector_store %arg12[%c0_29, %c0_30], %37 {strides = array<i32>} : memref<8x128xf32, #tpu.memory_space<vmem>>, vector<8x128xf32>,
    return
  }
  func.func @transform_0(%arg0: i32) -> (i32, i32) {
    %c0_i32 = arith.constant 0 : i32
    %c0_i32_0 = arith.constant 0 : i32
    return %arg0, %c0_i32 : i32, i32
  }
  func.func @transform_1(%arg0: i32) -> (i32, i32) {
    %c0_i32 = arith.constant 0 : i32
    %c0_i32_0 = arith.constant 0 : i32
    %c0_i32_1 = arith.constant 0 : i32
    return %c0_i32, %c0_i32_0 : i32, i32
  }
  func.func @transform_2(%arg0: i32) -> (i32, i32) {
    %c0_i32 = arith.constant 0 : i32
    %c0_i32_0 = arith.constant 0 : i32
    %c0_i32_1 = arith.constant 0 : i32
    return %c0_i32, %c0_i32_0 : i32, i32
  }
  func.func @transform_3(%arg0: i32) -> (i32, i32) {
    %c0_i32 = arith.constant 0 : i32
    %c0_i32_0 = arith.constant 0 : i32
    %c0_i32_1 = arith.constant 0 : i32
    return %c0_i32, %c0_i32_0 : i32, i32
  }
  func.func @transform_4(%arg0: i32) -> (i32, i32) {
    %c0_i32 = arith.constant 0 : i32
    %c0_i32_0 = arith.constant 0 : i32
    %c0_i32_1 = arith.constant 0 : i32
    return %c0_i32, %c0_i32_0 : i32, i32
  }
  func.func @transform_5(%arg0: i32) -> (i32, i32) {
    %c0_i32 = arith.constant 0 : i32
    %c0_i32_0 = arith.constant 0 : i32
    %c0_i32_1 = arith.constant 0 : i32
    return %c0_i32, %c0_i32_0 : i32, i32
  }
  func.func @transform_6(%arg0: i32) -> (i32, i32) {
    %c0_i32 = arith.constant 0 : i32
    %c0_i32_0 = arith.constant 0 : i32
    %c0_i32_1 = arith.constant 0 : i32
    return %c0_i32, %c0_i32_0 : i32, i32
  }
  func.func @transform_7(%arg0: i32) -> (i32, i32) {
    %c0_i32 = arith.constant 0 : i32
    %c0_i32_0 = arith.constant 0 : i32
    %c0_i32_1 = arith.constant 0 : i32
    return %c0_i32, %c0_i32_0 : i32, i32
  }
  func.func @transform_8(%arg0: i32) -> (i32, i32) {
    %c0_i32 = arith.constant 0 : i32
    %c0_i32_0 = arith.constant 0 : i32
    %c0_i32_1 = arith.constant 0 : i32
    return %c0_i32, %c0_i32_0 : i32, i32
  }
  func.func @transform_9(%arg0: i32) -> (i32, i32) {
    %c0_i32 = arith.constant 0 : i32
    %c0_i32_0 = arith.constant 0 : i32
    %c0_i32_1 = arith.constant 0 : i32
    return %c0_i32, %c0_i32_0 : i32, i32
  }
  func.func @transform_10(%arg0: i32) -> (i32, i32) {
    %c0_i32 = arith.constant 0 : i32
    %c0_i32_0 = arith.constant 0 : i32
    %c0_i32_1 = arith.constant 0 : i32
    return %c0_i32, %c0_i32_0 : i32, i32
  }
  func.func @transform_11(%arg0: i32) -> (i32, i32) {
    %c0_i32 = arith.constant 0 : i32
    %c0_i32_0 = arith.constant 0 : i32
    return %arg0, %c0_i32 : i32, i32
  }
}

</mosaic_0001>

<llo_original>
// kernel: neuralnet_forward.1
$region0: #{neuralnet_forward.1}
  #allocation0 [shape = 'u32[]', space=smem, size = 0x4, offset = 0x4, fixed_abs, tag = 'smem constant byte address 0x4 - core index']
  #allocation1 [shape = 'u32[72,128]{1,0:T(1,128)}', space=vmem, size = 0x9000, scoped, tag = 'internal scratch']
  %s0 = inlined_call_operand.vmem [shape: bf16[8,32], index: 0, kind: input, shape index: {}]
  %s1 = inlined_call_operand.vmem [shape: bf16[32,256], index: 1, kind: input, shape index: {}]
  %s2 = inlined_call_operand.vmem [shape: f32[1,256], index: 2, kind: input, shape index: {}]
  %s3 = inlined_call_operand.vmem [shape: bf16[256,128], index: 3, kind: input, shape index: {}]
  %s4 = inlined_call_operand.vmem [shape: f32[1,128], index: 4, kind: input, shape index: {}]
  %s5 = inlined_call_operand.vmem [shape: bf16[128,64], index: 5, kind: input, shape index: {}]
  %s6 = inlined_call_operand.vmem [shape: f32[1,64], index: 6, kind: input, shape index: {}]
  %s7 = inlined_call_operand.vmem [shape: bf16[64,32], index: 7, kind: input, shape index: {}]
  %s8 = inlined_call_operand.vmem [shape: f32[1,32], index: 8, kind: input, shape index: {}]
  %s9 = inlined_call_operand.vmem [shape: bf16[32,128], index: 9, kind: input, shape index: {}]
  %s10 = inlined_call_operand.vmem [shape: f32[1,128], index: 10, kind: input, shape index: {}]
  %s11 = inlined_call_operand.vmem [shape: f32[8,128], index: 11, kind: output, shape index: {}]
  %s12 = sld [smem:[#allocation0]]
  $region54: #{neuralnet_forward.1} parent=0
    _
  %s14 = ssub.s32 1, %s12
  %s15 = scalar_select 0, %s14, %s12
  // Predicated region
  $region2: #{neuralnet_forward.1} parent=0 // pred_check
    _
  $region3: #{neuralnet_forward.1} parent=0 // pred_check_branch
    %17 = sbr.rel (0) target = $region5
  $region4: #{neuralnet_forward.1} parent=0 // pred_region
    _
  $region5: #{neuralnet_forward.1} parent=0 // pred_fallthru
    _
  // Predicated region
  $region6: #{neuralnet_forward.1} parent=0 // pred_check
    _
  $region7: #{neuralnet_forward.1} parent=0 // pred_check_branch
    %19 = sbr.rel (0) target = $region9
  $region8: #{neuralnet_forward.1} parent=0 // pred_region
    _
  $region9: #{neuralnet_forward.1} parent=0 // pred_fallthru
    _
  // Predicated region
  $region10: #{neuralnet_forward.1} parent=0 // pred_check
    _
  $region11: #{neuralnet_forward.1} parent=0 // pred_check_branch
    %21 = sbr.rel (0) target = $region13
  $region12: #{neuralnet_forward.1} parent=0 // pred_region
    _
  $region13: #{neuralnet_forward.1} parent=0 // pred_fallthru
    _
  // Predicated region
  $region14: #{neuralnet_forward.1} parent=0 // pred_check
    _
  $region15: #{neuralnet_forward.1} parent=0 // pred_check_branch
    %23 = sbr.rel (0) target = $region17
  $region16: #{neuralnet_forward.1} parent=0 // pred_region
    _
  $region17: #{neuralnet_forward.1} parent=0 // pred_fallthru
    _
  // Predicated region
  $region18: #{neuralnet_forward.1} parent=0 // pred_check
    _
  $region19: #{neuralnet_forward.1} parent=0 // pred_check_branch
    %25 = sbr.rel (0) target = $region21
  $region20: #{neuralnet_forward.1} parent=0 // pred_region
    _
  $region21: #{neuralnet_forward.1} parent=0 // pred_fallthru
    _
  // Predicated region
  $region22: #{neuralnet_forward.1} parent=0 // pred_check
    _
  $region23: #{neuralnet_forward.1} parent=0 // pred_check_branch
    %27 = sbr.rel (0) target = $region25
  $region24: #{neuralnet_forward.1} parent=0 // pred_region
    _
  $region25: #{neuralnet_forward.1} parent=0 // pred_fallthru
    _
  // Predicated region
  $region26: #{neuralnet_forward.1} parent=0 // pred_check
    _
  $region27: #{neuralnet_forward.1} parent=0 // pred_check_branch
    %29 = sbr.rel (0) target = $region29
  $region28: #{neuralnet_forward.1} parent=0 // pred_region
    _
  $region29: #{neuralnet_forward.1} parent=0 // pred_fallthru
    _
  // Predicated region
  $region30: #{neuralnet_forward.1} parent=0 // pred_check
    _
  $region31: #{neuralnet_forward.1} parent=0 // pred_check_branch
    %31 = sbr.rel (0) target = $region33
  $region32: #{neuralnet_forward.1} parent=0 // pred_region
    _
  $region33: #{neuralnet_forward.1} parent=0 // pred_fallthru
    _
  // Predicated region
  $region34: #{neuralnet_forward.1} parent=0 // pred_check
    _
  $region35: #{neuralnet_forward.1} parent=0 // pred_check_branch
    %33 = sbr.rel (0) target = $region37
  $region36: #{neuralnet_forward.1} parent=0 // pred_region
    _
  $region37: #{neuralnet_forward.1} parent=0 // pred_fallthru
    _
  // Predicated region
  $region38: #{neuralnet_forward.1} parent=0 // pred_check
    _
  $region39: #{neuralnet_forward.1} parent=0 // pred_check_branch
    %35 = sbr.rel (0) target = $region41
  $region40: #{neuralnet_forward.1} parent=0 // pred_region
    _
  $region41: #{neuralnet_forward.1} parent=0 // pred_fallthru
    _
  // Predicated region
  $region42: #{neuralnet_forward.1} parent=0 // pred_check
    _
  $region43: #{neuralnet_forward.1} parent=0 // pred_check_branch
    %37 = sbr.rel (0) target = $region45
  $region44: #{neuralnet_forward.1} parent=0 // pred_region
    _
  $region45: #{neuralnet_forward.1} parent=0 // pred_fallthru
    _
  %v39 = vld [vmem:[%s0] sm:$0xf]
  %v40 = vld [vmem:[%s1] sm:$0xff]
  %v41 = vld [vmem:[%s1 + $0x8] sm:$0xff]
  %v42 = vld [vmem:[%s1 + $0x10] sm:$0xff]
  %v43 = vld [vmem:[%s1 + $0x18] sm:$0xff]
  %v44 = vld [vmem:[%s2] sm:$0x3]
  %v46 = vperm.slane %v44, 0
  %v47 = vperm.slane %v44, 1
  %v54 = vunpack.c.l.b16 %v40
  %v55 = vunpack.c.h.b16 %v40
  %v56 = vunpack.c.l.b16 %v41
  %v57 = vunpack.c.h.b16 %v41
  %v58 = vunpack.c.l.b16 %v42
  %v59 = vunpack.c.h.b16 %v42
  %v60 = vunpack.c.l.b16 %v43
  %v61 = vunpack.c.h.b16 %v43
  %v62 = vpack.c.b16 %v56, %v54
  %v63 = vpack.c.b16 %v57, %v55
  %v64 = vpack.c.b16 %v60, %v58
  %v65 = vpack.c.b16 %v61, %v59
  %vm70 = vcmask 261120
  %v72 = vsel %vm70, %v39, 0
  %74 = vmatpush.bf16.msra.mxu0 0
  %75 = vmatpush.bf16.msra.mxu0 0
  %76 = vmatpush.bf16.msra.mxu0 0
  %77 = vmatpush.bf16.msra.mxu0 0
  %78 = vmatpush.bf16.msra.mxu0 0
  %79 = vmatpush.bf16.msra.mxu0 0
  %80 = vmatpush.bf16.msra.mxu0 %v64
  %81 = vmatpush.bf16.msra.mxu0 %v62
  %82 = vmatmul.bf16.gmra.mxu0 %v72
  %v83 = vpop.f32.mrf.mxu0
  %v84 = vadd.f32 %v46, %v83
  %v85 = vpop.f32.mrf.mxu0
  %86 = vdwg.mxu0
  %87 = vmatpush.bf16.msra.mxu0 0
  %88 = vmatpush.bf16.msra.mxu0 0
  %89 = vmatpush.bf16.msra.mxu0 0
  %90 = vmatpush.bf16.msra.mxu0 0
  %91 = vmatpush.bf16.msra.mxu0 0
  %92 = vmatpush.bf16.msra.mxu0 0
  %93 = vmatpush.bf16.msra.mxu0 %v65
  %94 = vmatpush.bf16.msra.mxu0 %v63
  %95 = vmatmul.bf16.gmra.mxu0 %v72
  %v96 = vpop.f32.mrf.mxu0
  %v97 = vadd.f32 %v47, %v96
  %v98 = vpop.f32.mrf.mxu0
  %99 = vdwg.mxu0
  %v100 = vmax.f32 %v84, 0.0
  %v101 = vmax.f32 %v97, 0.0
  %v102 = vpack.c.bf16 %v100, %v100
  %v103 = vpack.c.bf16 %v101, %v101
  %v104 = vld [vmem:[%s3] sm:$0xf]
  %v105 = vld [vmem:[%s3 + $0x4] sm:$0xf]
  %v106 = vld [vmem:[%s3 + $0x8] sm:$0xf]
  %v107 = vld [vmem:[%s3 + $0xc] sm:$0xf]
  %v108 = vld [vmem:[%s3 + $0x10] sm:$0xf]
  %v109 = vld [vmem:[%s3 + $0x14] sm:$0xf]
  %v110 = vld [vmem:[%s3 + $0x18] sm:$0xf]
  %v111 = vld [vmem:[%s3 + $0x1c] sm:$0xf]
  %v112 = vld [vmem:[%s3 + $0x20] sm:$0xf]
  %v113 = vld [vmem:[%s3 + $0x24] sm:$0xf]
  %v114 = vld [vmem:[%s3 + $0x28] sm:$0xf]
  %v115 = vld [vmem:[%s3 + $0x2c] sm:$0xf]
  %v116 = vld [vmem:[%s3 + $0x30] sm:$0xf]
  %v117 = vld [vmem:[%s3 + $0x34] sm:$0xf]
  %v118 = vld [vmem:[%s3 + $0x38] sm:$0xf]
  %v119 = vld [vmem:[%s3 + $0x3c] sm:$0xf]
  %v120 = vld [vmem:[%s3 + $0x40] sm:$0xf]
  %v121 = vld [vmem:[%s3 + $0x44] sm:$0xf]
  %v122 = vld [vmem:[%s3 + $0x48] sm:$0xf]
  %v123 = vld [vmem:[%s3 + $0x4c] sm:$0xf]
  %v124 = vld [vmem:[%s3 + $0x50] sm:$0xf]
  %v125 = vld [vmem:[%s3 + $0x54] sm:$0xf]
  %v126 = vld [vmem:[%s3 + $0x58] sm:$0xf]
  %v127 = vld [vmem:[%s3 + $0x5c] sm:$0xf]
  %v128 = vld [vmem:[%s3 + $0x60] sm:$0xf]
  %v129 = vld [vmem:[%s3 + $0x64] sm:$0xf]
  %v130 = vld [vmem:[%s3 + $0x68] sm:$0xf]
  %v131 = vld [vmem:[%s3 + $0x6c] sm:$0xf]
  %v132 = vld [vmem:[%s3 + $0x70] sm:$0xf]
  %v133 = vld [vmem:[%s3 + $0x74] sm:$0xf]
  %v134 = vld [vmem:[%s3 + $0x78] sm:$0xf]
  %v135 = vld [vmem:[%s3 + $0x7c] sm:$0xf]
  %v136 = vld [vmem:[%s4] sm:$0x1]
  %v138 = vperm.slane %v136, 0
  %v172 = vunpack.c.l.b16 %v104
  %v173 = vunpack.c.l.b16 %v105
  %v174 = vunpack.c.l.b16 %v106
  %v175 = vunpack.c.l.b16 %v107
  %v176 = vunpack.c.l.b16 %v108
  %v177 = vunpack.c.l.b16 %v109
  %v178 = vunpack.c.l.b16 %v110
  %v179 = vunpack.c.l.b16 %v111
  %v180 = vunpack.c.l.b16 %v112
  %v181 = vunpack.c.l.b16 %v113
  %v182 = vunpack.c.l.b16 %v114
  %v183 = vunpack.c.l.b16 %v115
  %v184 = vunpack.c.l.b16 %v116
  %v185 = vunpack.c.l.b16 %v117
  %v186 = vunpack.c.l.b16 %v118
  %v187 = vunpack.c.l.b16 %v119
  %v188 = vunpack.c.l.b16 %v120
  %v189 = vunpack.c.l.b16 %v121
  %v190 = vunpack.c.l.b16 %v122
  %v191 = vunpack.c.l.b16 %v123
  %v192 = vunpack.c.l.b16 %v124
  %v193 = vunpack.c.l.b16 %v125
  %v194 = vunpack.c.l.b16 %v126
  %v195 = vunpack.c.l.b16 %v127
  %v196 = vunpack.c.l.b16 %v128
  %v197 = vunpack.c.l.b16 %v129
  %v198 = vunpack.c.l.b16 %v130
  %v199 = vunpack.c.l.b16 %v131
  %v200 = vunpack.c.l.b16 %v132
  %v201 = vunpack.c.l.b16 %v133
  %v202 = vunpack.c.l.b16 %v134
  %v203 = vunpack.c.l.b16 %v135
  %v204 = vpack.c.b16 %v173, %v172
  %v205 = vpack.c.b16 %v175, %v174
  %v206 = vpack.c.b16 %v177, %v176
  %v207 = vpack.c.b16 %v179, %v178
  %v208 = vpack.c.b16 %v181, %v180
  %v209 = vpack.c.b16 %v183, %v182
  %v210 = vpack.c.b16 %v185, %v184
  %v211 = vpack.c.b16 %v187, %v186
  %v212 = vpack.c.b16 %v189, %v188
  %v213 = vpack.c.b16 %v191, %v190
  %v214 = vpack.c.b16 %v193, %v192
  %v215 = vpack.c.b16 %v195, %v194
  %v216 = vpack.c.b16 %v197, %v196
  %v217 = vpack.c.b16 %v199, %v198
  %v218 = vpack.c.b16 %v201, %v200
  %v219 = vpack.c.b16 %v203, %v202
  %236 = vmatpush.bf16.msra.mxu0 %v211
  %237 = vmatpush.bf16.msra.mxu0 %v210
  %238 = vmatpush.bf16.msra.mxu0 %v209
  %239 = vmatpush.bf16.msra.mxu0 %v208
  %240 = vmatpush.bf16.msra.mxu0 %v207
  %241 = vmatpush.bf16.msra.mxu0 %v206
  %242 = vmatpush.bf16.msra.mxu0 %v205
  %243 = vmatpush.bf16.msra.mxu0 %v204
  %244 = vmatmul.bf16.gmra.mxu0 %v102
  %v245 = vpop.f32.mrf.mxu0
  %v246 = vadd.f32 %v138, %v245
  %v247 = vpop.f32.mrf.mxu0
  %248 = vdwg.mxu0
  %249 = vmatpush.bf16.msra.mxu0 %v219
  %250 = vmatpush.bf16.msra.mxu0 %v218
  %251 = vmatpush.bf16.msra.mxu0 %v217
  %252 = vmatpush.bf16.msra.mxu0 %v216
  %253 = vmatpush.bf16.msra.mxu0 %v215
  %254 = vmatpush.bf16.msra.mxu0 %v214
  %255 = vmatpush.bf16.msra.mxu0 %v213
  %256 = vmatpush.bf16.msra.mxu0 %v212
  %257 = vmatmul.bf16.gmra.mxu0 %v103
  %v258 = vpop.f32.mrf.mxu0
  %v259 = vadd.f32 %v246, %v258
  %v260 = vpop.f32.mrf.mxu0
  %261 = vdwg.mxu0
  %v262 = vmax.f32 %v259, 0.0
  %v263 = vpack.c.bf16 %v262, %v262
  %v264 = vld [vmem:[%s5] sm:$0xf]
  %v265 = vld [vmem:[%s5 + $0x4] sm:$0xf]
  %v266 = vld [vmem:[%s5 + $0x8] sm:$0xf]
  %v267 = vld [vmem:[%s5 + $0xc] sm:$0xf]
  %v268 = vld [vmem:[%s5 + $0x10] sm:$0xf]
  %v269 = vld [vmem:[%s5 + $0x14] sm:$0xf]
  %v270 = vld [vmem:[%s5 + $0x18] sm:$0xf]
  %v271 = vld [vmem:[%s5 + $0x1c] sm:$0xf]
  %v272 = vld [vmem:[%s5 + $0x20] sm:$0xf]
  %v273 = vld [vmem:[%s5 + $0x24] sm:$0xf]
  %v274 = vld [vmem:[%s5 + $0x28] sm:$0xf]
  %v275 = vld [vmem:[%s5 + $0x2c] sm:$0xf]
  %v276 = vld [vmem:[%s5 + $0x30] sm:$0xf]
  %v277 = vld [vmem:[%s5 + $0x34] sm:$0xf]
  %v278 = vld [vmem:[%s5 + $0x38] sm:$0xf]
  %v279 = vld [vmem:[%s5 + $0x3c] sm:$0xf]
  %v280 = vld [vmem:[%s6] sm:$0x1]
  %v282 = vperm.slane %v280, 0
  %v300 = vunpack.c.l.b16 %v264
  %v301 = vunpack.c.l.b16 %v265
  %v302 = vunpack.c.l.b16 %v266
  %v303 = vunpack.c.l.b16 %v267
  %v304 = vunpack.c.l.b16 %v268
  %v305 = vunpack.c.l.b16 %v269
  %v306 = vunpack.c.l.b16 %v270
  %v307 = vunpack.c.l.b16 %v271
  %v308 = vunpack.c.l.b16 %v272
  %v309 = vunpack.c.l.b16 %v273
  %v310 = vunpack.c.l.b16 %v274
  %v311 = vunpack.c.l.b16 %v275
  %v312 = vunpack.c.l.b16 %v276
  %v313 = vunpack.c.l.b16 %v277
  %v314 = vunpack.c.l.b16 %v278
  %v315 = vunpack.c.l.b16 %v279
  %v316 = vpack.c.b16 %v301, %v300
  %v317 = vpack.c.b16 %v303, %v302
  %v318 = vpack.c.b16 %v305, %v304
  %v319 = vpack.c.b16 %v307, %v306
  %v320 = vpack.c.b16 %v309, %v308
  %v321 = vpack.c.b16 %v311, %v310
  %v322 = vpack.c.b16 %v313, %v312
  %v323 = vpack.c.b16 %v315, %v314
  %332 = vmatpush.bf16.msra.mxu0 %v323
  %333 = vmatpush.bf16.msra.mxu0 %v322
  %334 = vmatpush.bf16.msra.mxu0 %v321
  %335 = vmatpush.bf16.msra.mxu0 %v320
  %336 = vmatpush.bf16.msra.mxu0 %v319
  %337 = vmatpush.bf16.msra.mxu0 %v318
  %338 = vmatpush.bf16.msra.mxu0 %v317
  %339 = vmatpush.bf16.msra.mxu0 %v316
  %340 = vmatmul.bf16.gmra.mxu0 %v263
  %v341 = vpop.f32.mrf.mxu0
  %v342 = vadd.f32 %v282, %v341
  %v343 = vpop.f32.mrf.mxu0
  %344 = vdwg.mxu0
  %v345 = vmax.f32 %v342, 0.0
  %v346 = vpack.c.bf16 %v345, %v345
  %v347 = vld [vmem:[%s7] sm:$0xf]
  %v348 = vld [vmem:[%s7 + $0x4] sm:$0xf]
  %v349 = vld [vmem:[%s7 + $0x8] sm:$0xf]
  %v350 = vld [vmem:[%s7 + $0xc] sm:$0xf]
  %v351 = vld [vmem:[%s7 + $0x10] sm:$0xf]
  %v352 = vld [vmem:[%s7 + $0x14] sm:$0xf]
  %v353 = vld [vmem:[%s7 + $0x18] sm:$0xf]
  %v354 = vld [vmem:[%s7 + $0x1c] sm:$0xf]
  %v355 = vld [vmem:[%s8] sm:$0x1]
  %v357 = vperm.slane %v355, 0
  %v367 = vunpack.c.l.b16 %v347
  %v368 = vunpack.c.l.b16 %v348
  %v369 = vunpack.c.l.b16 %v349
  %v370 = vunpack.c.l.b16 %v350
  %v371 = vunpack.c.l.b16 %v351
  %v372 = vunpack.c.l.b16 %v352
  %v373 = vunpack.c.l.b16 %v353
  %v374 = vunpack.c.l.b16 %v354
  %v375 = vpack.c.b16 %v368, %v367
  %v376 = vpack.c.b16 %v370, %v369
  %v377 = vpack.c.b16 %v372, %v371
  %v378 = vpack.c.b16 %v374, %v373
  %vm383 = vcmask 523264
  %v385 = vsel %vm383, %v346, 0
  %387 = vmatpush.bf16.msra.mxu0 0
  %388 = vmatpush.bf16.msra.mxu0 0
  %389 = vmatpush.bf16.msra.mxu0 0
  %390 = vmatpush.bf16.msra.mxu0 0
  %391 = vmatpush.bf16.msra.mxu0 %v378
  %392 = vmatpush.bf16.msra.mxu0 %v377
  %393 = vmatpush.bf16.msra.mxu0 %v376
  %394 = vmatpush.bf16.msra.mxu0 %v375
  %395 = vmatmul.bf16.gmra.mxu0 %v385
  %v396 = vpop.f32.mrf.mxu0
  %v397 = vadd.f32 %v357, %v396
  %v398 = vpop.f32.mrf.mxu0
  %399 = vdwg.mxu0
  %v400 = vmax.f32 %v397, 0.0
  %v401 = vpack.c.bf16 %v400, %v400
  %v402 = vld [vmem:[%s9] sm:$0xf]
  %v403 = vld [vmem:[%s9 + $0x4] sm:$0xf]
  %v404 = vld [vmem:[%s9 + $0x8] sm:$0xf]
  %v405 = vld [vmem:[%s9 + $0xc] sm:$0xf]
  %v406 = vld [vmem:[%s10] sm:$0x1]
  %v408 = vperm.slane %v406, 0
  %v414 = vunpack.c.l.b16 %v402
  %v415 = vunpack.c.l.b16 %v403
  %v416 = vunpack.c.l.b16 %v404
  %v417 = vunpack.c.l.b16 %v405
  %v418 = vpack.c.b16 %v415, %v414
  %v419 = vpack.c.b16 %v417, %v416
  %v423 = vsel %vm70, %v401, 0
  %425 = vmatpush.bf16.msra.mxu0 0
  %426 = vmatpush.bf16.msra.mxu0 0
  %427 = vmatpush.bf16.msra.mxu0 0
  %428 = vmatpush.bf16.msra.mxu0 0
  %429 = vmatpush.bf16.msra.mxu0 0
  %430 = vmatpush.bf16.msra.mxu0 0
  %431 = vmatpush.bf16.msra.mxu0 %v419
  %432 = vmatpush.bf16.msra.mxu0 %v418
  %433 = vmatmul.bf16.gmra.mxu0 %v423
  %v434 = vpop.f32.mrf.mxu0
  %v435 = vadd.f32 %v408, %v434
  %v436 = vpop.f32.mrf.mxu0
  %437 = vdwg.mxu0
  %438 = vst [vmem:[%s11] sm:$0xff] %v435
  // Predicated region
  $region46: #{neuralnet_forward.1} parent=0 // pred_check
    _
  $region47: #{neuralnet_forward.1} parent=0 // pred_check_branch
    %440 = sbr.rel (0) target = $region49
  $region48: #{neuralnet_forward.1} parent=0 // pred_region
    _
  $region49: #{neuralnet_forward.1} parent=0 // pred_fallthru
    _
  // Predicated region
  $region50: #{neuralnet_forward.1} parent=0 // pred_check
    _
  $region51: #{neuralnet_forward.1} parent=0 // pred_check_branch
    %442 = sbr.rel (0) target = $region53
  $region52: #{neuralnet_forward.1} parent=0 // pred_region
    _
  $region53: #{neuralnet_forward.1} parent=0 // pred_fallthru
    _

</llo_original>
